<compile_context>
chip_gen: v7x
topology: tpu7x:2x2x1
jax: 0.10.0
libtpu: 0.0.40
codegen_flags: <defaults>
</compile_context>

<pallas_src>
import functools

import numpy as np
import jax
import jax.numpy as jnp
from jax import lax
from jax.experimental import pallas as pl
from jax.experimental.pallas import tpu as pltpu

# cubic resampling kernel (same values as _kernels['cubic'] in the reference)
_CUBIC = (-0.01171875, -0.03515625, 0.11328125, 0.43359375,
          0.43359375, 0.11328125, -0.03515625, -0.01171875)
_K = len(_CUBIC)                 # 8
_PAD_DOWN = _K // 2 - 1          # 3   (self.pad in the module)
_PAD_UP = (_PAD_DOWN + 1) // 2   # 2   ((self.pad + 1) // 2)


def _vmem_capacity_bytes():
    try:
        return int(pltpu.get_tpu_info().vmem_capacity_bytes)
    except Exception:
        return 64 * 1024 * 1024   # conservative fallback (= v7x per-TC VMEM)


def _ceil_to(n, m):
    return -(-n // m) * m


# ---------------------------------------------------------------------------
# Pallas kernel (shared by up / down)
# ---------------------------------------------------------------------------
def _fir_resample_kernel(x_ref, m_ref, o_ref, *, chunks, precision):
    """FIR-resample one block of rows via constant banded matrices on the MXU.

    x_ref : (tr, w)              input rows (native dtype)
    m_ref : (n_mats, kin, kout)  constant per-chunk-type filter matrices
                                 (reflection + decimation/interleave folded in)
    o_ref : (tr, w_out)          output rows
    chunks: static tuple of (out_col_start, in_window_start, matrix_index)
    """
    kin = m_ref.shape[1]
    kout = m_ref.shape[2]
    for s, a, mi in chunks:            # unrolled at trace time
        acc = jnp.dot(x_ref[:, a:a + kin], m_ref[mi],
                      preferred_element_type=jnp.float32,
                      precision=precision)
        o_ref[:, s:s + kout] = acc.astype(o_ref.dtype)


# ---------------------------------------------------------------------------
# Constant chunk matrices (built once at trace time; tiny)
# ---------------------------------------------------------------------------
def _reflect(i, w):
    if i < 0:
        i = -i                      # x_pad[p] = x[pad - p]   (left)
    if i >= w:
        i = 2 * (w - 1) - i         # x_pad[...] = x[w - 2 - d] (right)
    return i


def _down_chunk_matrix(w, s, kout, kin, a):
    # F.conv1d(stride=2): out[j] = sum_t k[t] * reflect_pad(x)[2*j + t]
    m = np.zeros((kin, kout), np.float64)
    for jl in range(kout):
        for t in range(_K):
            xi = _reflect(2 * (s + jl) + t - _PAD_DOWN, w)
            row = xi - a
            assert 0 <= row < kin
            m[row, jl] += _CUBIC[t]
    return m


def _up_chunk_matrix(w, s, kout, kin, a):
    # F.conv_transpose1d(stride=2, padding=2*pad+1), interleave folded in:
    #   out[2j]   = k7*xp[j]   + k5*xp[j+1] + k3*xp[j+2] + k1*xp[j+3]
    #   out[2j+1] = k6*xp[j+1] + k4*xp[j+2] + k2*xp[j+3] + k0*xp[j+4]
    # with xp = reflect_pad(x, 2); reflection folded into the matrix.
    m = np.zeros((kin, kout), np.float64)
    even = ((0, 7), (1, 5), (2, 3), (3, 1))
    odd = ((1, 6), (2, 4), (3, 2), (4, 0))
    for c in range(kout):
        o = s + c
        jj = o // 2
        for d, kt in (even if o % 2 == 0 else odd):
            xi = _reflect(jj + d - _PAD_UP, w)
            row = xi - a
            assert 0 <= row < kin
            m[row, c] += _CUBIC[kt]
    return m


def _plan_chunks(w, w_out, kout, kin, up):
    """Static chunk plan: [(out_start, window_start, mat_idx)] + deduped mats."""
    starts = list(range(0, w_out - kout + 1, kout))
    if starts[-1] != w_out - kout:
        starts.append(w_out - kout)   # ragged tail: overlap (recomputed cols identical)
    build = _up_chunk_matrix if up else _down_chunk_matrix
    mats, seen, chunks = [], {}, []
    for s in starts:
        a_des = (s // 2 - _PAD_UP) if up else (2 * s - _PAD_DOWN)
        a = min(max(a_des, 0), w - kin)          # clamp window into the array
        m = build(w, s, kout, kin, a)
        key = m.tobytes()
        idx = seen.get(key)
        if idx is None:                          # interior chunks dedupe to one matrix
            idx = len(mats)
            seen[key] = idx
            mats.append(m)
        chunks.append((s, a, idx))
    return tuple(chunks), np.stack(mats, axis=0).astype(np.float32)


# ---------------------------------------------------------------------------
# Wrappers: row tiling, grid, pallas_call
# ---------------------------------------------------------------------------
def _row_tile(r, w_in, w_out, itemsize, vmem_cap):
    q = max(8, 32 // itemsize)                   # sublane quantum (f32 8, bf16 16)
    per_row = (w_in + w_out) * itemsize          # block bytes per row (single buffer)
    budget = max(vmem_cap // 8, 2 << 20)         # ~8 MiB/step v7x, ~16 MiB v5e/v6e
    tr = max(q, min(budget // per_row, 4096) // q * q)
    # keep >= 4 grid steps (>= 2 per v7x TensorCore) whenever rows allow it
    tr_steps = max(q, _ceil_to(-(-r // 4), q))
    return max(q, min(tr, tr_steps))


def _resample_rows(x2d, mats_np, chunks, w_out):
    r, w = x2d.shape
    dtype = x2d.dtype
    if dtype == jnp.bfloat16:
        mat_dtype, precision = jnp.bfloat16, lax.Precision.DEFAULT
    else:
        mat_dtype, precision = jnp.float32, lax.Precision.HIGHEST
    mats = jnp.asarray(mats_np, dtype=mat_dtype)

    itemsize = jnp.dtype(dtype).itemsize
    vmem_cap = _vmem_capacity_bytes()
    tr = _row_tile(r, w, w_out, itemsize, vmem_cap)

    # scoped-VMEM limit derived from the actual double-buffered working set
    need = 2 * tr * (w + w_out) * itemsize + 2 * mats.size * mats.dtype.itemsize
    vmem_limit = min(max(int(need * 1.5) + (4 << 20), 16 << 20), (vmem_cap * 3) // 4)

    kernel = functools.partial(_fir_resample_kernel, chunks=chunks,
                               precision=precision)
    return pl.pallas_call(
        kernel,
        out_shape=jax.ShapeDtypeStruct((r, w_out), dtype),
        grid=(pl.cdiv(r, tr),),                        # partial last block OK
        in_specs=[pl.BlockSpec((tr, w), lambda i: (i, 0)),
                  pl.BlockSpec(mats.shape, lambda i: (0, 0, 0))],
        out_specs=pl.BlockSpec((tr, w_out), lambda i: (i, 0)),
        compiler_params=pltpu.CompilerParams(
            dimension_semantics=("parallel",),
            vmem_limit_bytes=int(vmem_limit)),
    )(x2d, mats)


def updown_resample_down(x, *, chunk=256):
    """UpDownResample(down=True, mode_resample='T', resample_filter='cubic')."""
    b, c, h, w = x.shape
    assert w % 2 == 0 and w > _PAD_DOWN, "W must be even and > 3 (reflect pad)"
    bw = min(chunk, w)
    bw -= bw % 2
    kout = bw // 2
    kin = min(bw + 2 * _PAD_DOWN, w)
    chunks, mats = _plan_chunks(w, w // 2, kout, kin, up=False)
    out = _resample_rows(x.reshape(b * c * h, w), mats, chunks, w // 2)
    return out.reshape(b, c, h, w // 2)


def updown_resample_up(x, *, chunk=256):
    """UpDownResample(up=True, mode_resample='T', resample_filter='cubic')."""
    b, c, h, w = x.shape
    assert w > _PAD_UP, "W must be > 2 (reflect pad)"
    nc = min(chunk, 2 * w)
    nc -= nc % 2
    kout = nc
    kin = min(nc // 2 + 2 * _PAD_UP, w)
    chunks, mats = _plan_chunks(w, 2 * w, kout, kin, up=True)
    out = _resample_rows(x.reshape(b * c * h, w), mats, chunks, 2 * w)
    return out.reshape(b, c, h, 2 * w)


# ---------------------------------------------------------------------------
# Pure-JAX references (mirror the PyTorch conv1d / conv_transpose1d semantics)
# ---------------------------------------------------------------------------
def _ref_down(x):
    b, c, h, w = x.shape
    xr = x.reshape(-1, h, w)
    xp = jnp.pad(xr, ((0, 0), (0, 0), (_PAD_DOWN, _PAD_DOWN)), mode="reflect")
    lout = (xp.shape[-1] - _K) // 2 + 1
    out = sum(_CUBIC[t] * xp[..., t:t + 2 * (lout - 1) + 1:2]
              for t in range(_K))
    return out.reshape(b, -1, h, lout)


def _ref_up(x):
    b, c, h, w = x.shape
    xr = x.reshape(-1, h, w)
    xp = jnp.pad(xr, ((0, 0), (0, 0), (_PAD_UP, _PAD_UP)), mode="reflect")
    li = xp.shape[-1]
    p_t = 2 * _PAD_DOWN + 1                   # conv_transpose padding = 7
    lo = (li - 1) * 2 - 2 * p_t + _K
    z = jnp.zeros(xr.shape[:-1] + (2 * li - 1,), xp.dtype)
    z = z.at[..., ::2].set(xp)
    kf = _CUBIC[::-1]
    out = sum(kf[t] * z[..., t:t + lo] for t in range(_K))
    return out.reshape(b, -1, h, lo)


# ---------------------------------------------------------------------------
if __name__ == "__main__":
    key = jax.random.PRNGKey(0)
    k1, k2, k3, k4 = jax.random.split(key, 4)

    # 1) module-sized smoke test (B,C,H,W)=(2,4,16,16); integer-valued f32 is
    #    exact through the filter, so indexing / reflection bugs show exactly.
    x = jax.random.randint(k1, (2, 4, 16, 16), -2, 3).astype(jnp.float32)
    yd = jax.block_until_ready(updown_resample_down(x))
    yu = jax.block_until_ready(updown_resample_up(x))
    assert yd.shape == (2, 4, 16, 8), yd.shape
    assert yu.shape == (2, 4, 16, 32), yu.shape
    assert jnp.allclose(yd, _ref_down(x), rtol=1e-5, atol=1e-5)
    assert jnp.allclose(yu, _ref_up(x), rtol=1e-5, atol=1e-5)

    # 2) ragged row count + multi-chunk + boundary matrices + partial last
    #    row block (no host-side pad/slice).  First integers (exact), then
    #    real-valued f32 (tolerance test for the f32 MXU path).
    xi = jax.random.randint(k2, (1, 3, 5, 272), -2, 3).astype(jnp.float32)
    assert jnp.allclose(updown_resample_down(xi), _ref_down(xi), rtol=1e-5, atol=1e-5)
    assert jnp.allclose(updown_resample_up(xi), _ref_up(xi), rtol=1e-5, atol=1e-5)
    xr = jax.random.normal(k3, (1, 3, 5, 272), jnp.float32)
    assert jnp.allclose(updown_resample_down(xr), _ref_down(xr), rtol=1e-3, atol=1e-3)
    assert jnp.allclose(updown_resample_up(xr), _ref_up(xr), rtol=1e-3, atol=1e-3)

    # 3) bf16 path: bf16 MXU operands, f32 accumulation, bf16 output.
    xb = jax.random.normal(k4, (2, 4, 8, 384), jnp.float32).astype(jnp.bfloat16)
    ydb = jax.block_until_ready(updown_resample_down(xb))
    yub = jax.block_until_ready(updown_resample_up(xb))
    assert ydb.dtype == jnp.bfloat16 and yub.dtype == jnp.bfloat16
    xf = xb.astype(jnp.float32)
    assert jnp.allclose(ydb.astype(jnp.float32), _ref_down(xf), rtol=5e-2, atol=5e-2)
    assert jnp.allclose(yub.astype(jnp.float32), _ref_up(xf), rtol=5e-2, atol=5e-2)

    print("KERNEL_OK")
</pallas_src>

<mosaic_0001>
module attributes {stable_mosaic.version = 11 : i64} {
  func.func @_fir_resample_kernel(%arg0: i32, %arg1: memref<32x16xf32, #tpu.memory_space<vmem>>, %arg2: memref<1x16x8xf32, #tpu.memory_space<vmem>>, %arg3: memref<32x8xf32, #tpu.memory_space<vmem>>) attributes {dimension_semantics = [#tpu.dimension_semantics<parallel>], iteration_bounds = array<i64: 4>, scalar_prefetch = 0 : i64, scratch_operands = 0 : i64, tpu.core_type = #tpu.core_type<tc>, window_params = [{transform_indices = @transform_0, window_bounds = array<i64: 32, 16>}, {pipeline_mode = #tpu.pipeline_mode<synchronous>, transform_indices = @transform_1, window_bounds = array<i64: 1, 16, 8>}, {transform_indices = @transform_2, window_bounds = array<i64: 32, 8>}]} {
    %c0 = arith.constant 0 : index
    %c0_0 = arith.constant 0 : index
    %0 = vector.load %arg1[%c0, %c0_0] : memref<32x16xf32, #tpu.memory_space<vmem>>, vector<32x16xf32>
    %c0_1 = arith.constant 0 : index
    %c0_2 = arith.constant 0 : index
    %c0_3 = arith.constant 0 : index
    %1 = vector.load %arg2[%c0_1, %c0_2, %c0_3] : memref<1x16x8xf32, #tpu.memory_space<vmem>>, vector<1x16x8xf32>
    %2 = vector.shape_cast %1 : vector<1x16x8xf32> to vector<16x8xf32>
    %cst = arith.constant dense<0.000000e+00> : vector<32x8xf32>
    %3 = tpu.matmul %0, %2, %cst {dimension_numbers = #tpu.dot_dimension_numbers<[1], [0], [0], [1], [0, 0, 1, 1], [], []>, precision = #tpu.contract_precision<fp32>} : vector<32x16xf32>, vector<16x8xf32>, vector<32x8xf32> -> vector<32x8xf32>
    %c0_4 = arith.constant 0 : index
    %c0_5 = arith.constant 0 : index
    %4 = vector.load %arg3[%c0_4, %c0_5] : memref<32x8xf32, #tpu.memory_space<vmem>>, vector<32x8xf32>
    tpu.vector_store %arg3[%c0_4, %c0_5], %3 {strides = array<i32>} : memref<32x8xf32, #tpu.memory_space<vmem>>, vector<32x8xf32>,
    return
  }
  func.func @transform_0(%arg0: i32) -> (i32, i32) {
    %c0_i32 = arith.constant 0 : i32
    %c0_i32_0 = arith.constant 0 : i32
    return %arg0, %c0_i32 : i32, i32
  }
  func.func @transform_1(%arg0: i32) -> (i32, i32, i32) {
    %c0_i32 = arith.constant 0 : i32
    %c0_i32_0 = arith.constant 0 : i32
    %c0_i32_1 = arith.constant 0 : i32
    %c0_i32_2 = arith.constant 0 : i32
    return %c0_i32, %c0_i32_0, %c0_i32_1 : i32, i32, i32
  }
  func.func @transform_2(%arg0: i32) -> (i32, i32) {
    %c0_i32 = arith.constant 0 : i32
    %c0_i32_0 = arith.constant 0 : i32
    return %arg0, %c0_i32 : i32, i32
  }
}

</mosaic_0001>

<llo_original>
// kernel: tpu_custom_call.1
$region0: #{tpu_custom_call.1}
  #allocation0 [shape = 'u32[]', space=smem, size = 0x4, offset = 0x4, fixed_abs, tag = 'smem constant byte address 0x4 - core index']
  #allocation1 [shape = 'u32[144,128]{1,0:T(1,128)}', space=vmem, size = 0x12000, scoped, tag = 'internal scratch']
  %s0 = inlined_call_operand.vmem [shape: f32[128,16], index: 0, kind: input, shape index: {}]
  %s1 = inlined_call_operand.vmem [shape: f32[1,16,8], index: 1, kind: input, shape index: {}]
  %s2 = inlined_call_operand.vmem [shape: f32[128,8], index: 2, kind: output, shape index: {}]
  %s3 = sld [smem:[#allocation0]]
  $region41: #{tpu_custom_call.1} parent=0
    _
  %s5 = ssub.s32 1, %s3
  %s6 = scalar_select 0, %s5, %s3
  loop: start=0, step=1, limit=6
  $region2: #{tpu_custom_call.1} parent=0 // loop_pre_header
    _
  $region3: #{tpu_custom_call.1} parent=0 // loop_header
    %s8 = sphi 0, %s12
    %p9 = scmp.ge.s32.totalorder %s8, 6
    %s18 = sphi 0, %s20
    %s21 = sphi 0, %s18
    %s22 = sphi 0, %s21
    %s38 = sphi 0, %s22
    %s42 = sphi 0, %s42
    %s44 = sphi 0, %s42
    %s45 = sphi 0, %s44
    %s59 = sphi 0, %s45
    %s65 = sphi 0, %s67
    %s68 = sphi 0, %s65
    %s69 = sphi 0, %s68
    %s85 = sphi 0, %s69
  $region4: #{tpu_custom_call.1} parent=0 // loop_header_branch
    %11 = sbr.rel (%p9) target = $region8
  $region5: #{tpu_custom_call.1} parent=0 // loop_body
    %s13 = ssub.s32 %s8, 1
    %s14 = ssub.s32 %s8, 2
    %s15 = sadd.s32 %s8, 1
    %s16 = ssub.s32 %s8, %s15
    %p17 = scmp.eq.s32.totalorder %s16, 0
    %s19 = sadd.s32 %s18, 1
    %s20 = scalar_select %p17, %s18, %s19
    %p23 = pneg %p17
    %p24 = scmp.eq.s32.totalorder %s8, 3
    %p25 = por %p23, %p24
    %p26 = scmp.ne.s32.totalorder %s18, %s21
    %p27 = scmp.eq.s32.totalorder %s8, 0
    %p28 = por %p26, %p27
    %p29 = scmp.ne.s32.totalorder %s18, %s21
    %p30 = scmp.eq.s32.totalorder %s13, 3
    %p31 = por %p29, %p30
    %p32 = scmp.ne.s32.totalorder %s21, %s22
    %p33 = scmp.eq.s32.totalorder %s13, 0
    %p34 = por %p32, %p33
    %p35 = scmp.ne.s32.totalorder %s21, %s22
    %p36 = scmp.eq.s32.totalorder %s14, 3
    %p37 = por %p35, %p36
    %p39 = scmp.ne.s32.totalorder %s22, %s38
    %p40 = scmp.eq.s32.totalorder %s14, 0
    %p41 = por %p39, %p40
    %s43 = sadd.s32 %s42, 1
    %p46 = scmp.eq.s32.totalorder %s8, 3
    %p47 = scmp.ne.s32.totalorder %s42, %s44
    %p48 = scmp.eq.s32.totalorder %s8, 0
    %p49 = por %p47, %p48
    %p50 = scmp.ne.s32.totalorder %s42, %s44
    %p51 = scmp.eq.s32.totalorder %s13, 3
    %p52 = por %p50, %p51
    %p53 = scmp.ne.s32.totalorder %s44, %s45
    %p54 = scmp.eq.s32.totalorder %s13, 0
    %p55 = por %p53, %p54
    %p56 = scmp.ne.s32.totalorder %s44, %s45
    %p57 = scmp.eq.s32.totalorder %s14, 3
    %p58 = por %p56, %p57
    %p60 = scmp.ne.s32.totalorder %s45, %s59
    %p61 = scmp.eq.s32.totalorder %s14, 0
    %p62 = por %p60, %p61
    %s63 = ssub.s32 %s8, %s15
    %p64 = scmp.eq.s32.totalorder %s63, 0
    %s66 = sadd.s32 %s65, 1
    %s67 = scalar_select %p64, %s65, %s66
    %p70 = pneg %p64
    %p71 = scmp.eq.s32.totalorder %s8, 3
    %p72 = por %p70, %p71
    %p73 = scmp.ne.s32.totalorder %s65, %s68
    %p74 = scmp.eq.s32.totalorder %s8, 0
    %p75 = por %p73, %p74
    %p76 = scmp.ne.s32.totalorder %s65, %s68
    %p77 = scmp.eq.s32.totalorder %s13, 3
    %p78 = por %p76, %p77
    %p79 = scmp.ne.s32.totalorder %s68, %s69
    %p80 = scmp.eq.s32.totalorder %s13, 0
    %p81 = por %p79, %p80
    %p82 = scmp.ne.s32.totalorder %s68, %s69
    %p83 = scmp.eq.s32.totalorder %s14, 3
    %p84 = por %p82, %p83
    %p86 = scmp.ne.s32.totalorder %s69, %s85
    %p87 = scmp.eq.s32.totalorder %s14, 0
    %p88 = por %p86, %p87
    %p89 = scmp.le.s32.totalorder 1, %s8
    %p90 = scmp.lt.s32.totalorder %s8, 5
    %p91 = pnand %p89, %p90
    %p92 = pneg %p91
    // Predicated region
    $region9: #{tpu_custom_call.1} parent=5 // pred_check
      _
    $region10: #{tpu_custom_call.1} parent=5 // pred_check_branch
      %94 = sbr.rel (%p91) target = $region12
    $region11: #{tpu_custom_call.1} parent=5 // pred_region
      %s95 = ssub.s32 %s8, 1
      // Predicated region
      $region13: #{tpu_custom_call.1} parent=11 // pred_check
        %p96 = pneg %p55
      $region14: #{tpu_custom_call.1} parent=11 // pred_check_branch
        %98 = sbr.rel (%p96) target = $region16
      $region15: #{tpu_custom_call.1} parent=11 // pred_region
        _
      $region16: #{tpu_custom_call.1} parent=11 // pred_fallthru
        _
    $region12: #{tpu_custom_call.1} parent=5 // pred_fallthru
      _
    %p99 = scmp.lt.s32.totalorder %s8, 4
    // Predicated region
    $region17: #{tpu_custom_call.1} parent=5 // pred_check
      %p100 = pneg %p99
    $region18: #{tpu_custom_call.1} parent=5 // pred_check_branch
      %102 = sbr.rel (%p100) target = $region20
    $region19: #{tpu_custom_call.1} parent=5 // pred_region
      // Predicated region
      $region21: #{tpu_custom_call.1} parent=19 // pred_check
        %p103 = pneg %p28
      $region22: #{tpu_custom_call.1} parent=19 // pred_check_branch
        %105 = sbr.rel (%p103) target = $region24
      $region23: #{tpu_custom_call.1} parent=19 // pred_region
        %s106 = smul.u32 4, %s8
        %p107 = scmp.lt.s32.totalorder %s106, 15
        %s108 = scalar_select %p107, %s106, 15
        %s109 = smul.addr %s108, 8
        %s110 = scalar_lea.vmem %s0, %s109
        %s111 = smul.u32 4, %s8
      $region24: #{tpu_custom_call.1} parent=19 // pred_fallthru
        _
    $region20: #{tpu_custom_call.1} parent=5 // pred_fallthru
      _
    %p112 = scmp.le.s32.totalorder 1, %s8
    %p113 = scmp.lt.s32.totalorder %s8, 5
    %p114 = pnand %p112, %p113
    %p115 = pneg %p114
    // Predicated region
    $region25: #{tpu_custom_call.1} parent=5 // pred_check
      _
    $region26: #{tpu_custom_call.1} parent=5 // pred_check_branch
      %117 = sbr.rel (%p114) target = $region28
    $region27: #{tpu_custom_call.1} parent=5 // pred_region
      %s118 = ssub.s32 %s8, 1
      %s119 = smul.u32 4, %s13
      %p120 = scmp.lt.s32.totalorder %s119, 15
      %s121 = scalar_select %p120, %s119, 15
      %s122 = smul.addr %s121, 8
      %s123 = scalar_lea.vmem %s0, %s122
      %p124 = pneg %p34
      %p125 = pneg %p31
      %p126 = pneg %p55
      %p127 = pneg %p52
      %p128 = pneg %p81
      %p129 = pneg %p78
      %s130 = smul.u32 4, %s13
      %p131 = scmp.lt.s32.totalorder %s130, 15
      %s132 = scalar_select %p131, %s130, 15
      %s133 = smul.addr %s132, 8
      %s134 = scalar_lea.vmem %s2, %s133
      %s135 = smul.u32 4, %s13
      %p136 = scmp.lt.s32.totalorder %s135, 15
      %s137 = scalar_select %p136, %s135, 15
      %s138 = smul.addr %s137, 8
      %s139 = scalar_lea.vmem %s0, %s138
      %s140 = smul.u32 4, %s13
      %s141 = smul.u32 4, %s13
      %p142 = scmp.lt.s32.totalorder %s141, 15
      %s143 = scalar_select %p142, %s141, 15
      %s144 = smul.addr %s143, 8
      %s145 = scalar_lea.vmem %s2, %s144
      %s146 = smul.u32 4, %s13
      %v147 = vld [vmem:[%s139] sm:$0xff]
      %v148 = vld [vmem:[%s139 + $0x8] sm:$0xff]
      %v149 = vld [vmem:[%s139 + $0x10] sm:$0xff]
      %v150 = vld [vmem:[%s139 + $0x18] sm:$0xff]
      %v151 = vld [vmem:[%s1] sm:$0xff]
      %v152 = vld [vmem:[%s1 + $0x8] sm:$0xff]
      %vm153 = vcmask 130048
      %v155 = vsel %vm153, %v147, 0
      %v158 = vsel %vm153, %v148, 0
      %v161 = vsel %vm153, %v149, 0
      %v164 = vsel %vm153, %v150, 0
      %166 = vmatprep.subr.mxu0 0.0
      %v167 = vand.u32 %v151, 4294901760
      %168 = vmatpush1.msra.mxu0 %v167
      %169 = vmatprep.subr.mxu0 0.0
      %v170 = vand.u32 %v152, 4294901760
      %171 = vmatpush1.msra.mxu0 %v170
      %172 = vmatprep.subr.mxu0 0.0
      %173 = vmatpush1.msra.mxu0 0.0
      %174 = vmatprep.subr.mxu0 0.0
      %175 = vmatpush1.msra.mxu0 0.0
      %176 = vmatprep.subr.mxu0 0.0
      %177 = vmatpush1.msra.mxu0 0.0
      %178 = vmatprep.subr.mxu0 0.0
      %179 = vmatpush1.msra.mxu0 0.0
      %180 = vmatprep.subr.mxu0 0.0
      %181 = vmatpush1.msra.mxu0 0.0
      %182 = vmatprep.subr.mxu0 0.0
      %183 = vmatpush1.msra.mxu0 0.0
      %184 = vmatprep.subr.mxu0 0.0
      %185 = vmatpush1.msra.mxu0 0.0
      %186 = vmatprep.subr.mxu0 0.0
      %187 = vmatpush1.msra.mxu0 0.0
      %188 = vmatprep.subr.mxu0 0.0
      %189 = vmatpush1.msra.mxu0 0.0
      %190 = vmatprep.subr.mxu0 0.0
      %191 = vmatpush1.msra.mxu0 0.0
      %192 = vmatprep.subr.mxu0 0.0
      %193 = vmatpush1.msra.mxu0 0.0
      %194 = vmatprep.subr.mxu0 0.0
      %195 = vmatpush1.msra.mxu0 0.0
      %196 = vmatprep.subr.mxu0 0.0
      %197 = vmatpush1.msra.mxu0 0.0
      %198 = vmatprep.subr.mxu0 0.0
      %199 = vmatpush1.msra.mxu0 0.0
      %200 = vmatprep.subr.mxu0 0.0
      %201 = vmatpush1.msra.mxu0 0.0
      %202 = vmatprep.subr.mxu0 0.0
      %203 = vmatpush1.msra.mxu0 0.0
      %204 = vmatprep.subr.mxu0 0.0
      %205 = vmatpush1.msra.mxu0 0.0
      %206 = vmatprep.subr.mxu0 0.0
      %207 = vmatpush1.msra.mxu0 0.0
      %208 = vmatprep.subr.mxu0 0.0
      %209 = vmatpush1.msra.mxu0 0.0
      %210 = vmatprep.subr.mxu0 0.0
      %211 = vmatpush1.msra.mxu0 0.0
      %212 = vmatprep.subr.mxu0 0.0
      %213 = vmatpush1.msra.mxu0 0.0
      %214 = vmatprep.subr.mxu0 0.0
      %215 = vmatpush1.msra.mxu0 0.0
      %216 = vmatprep.subr.mxu0 0.0
      %217 = vmatpush1.msra.mxu0 0.0
      %218 = vmatprep.subr.mxu0 0.0
      %219 = vmatpush1.msra.mxu0 0.0
      %220 = vmatprep.subr.mxu0 0.0
      %221 = vmatpush1.msra.mxu0 0.0
      %222 = vmatprep.subr.mxu0 0.0
      %223 = vmatpush1.msra.mxu0 0.0
      %224 = vmatprep.subr.mxu0 0.0
      %225 = vmatpush1.msra.mxu0 0.0
      %226 = vmatprep.subr.mxu0 0.0
      %227 = vmatpush1.msra.mxu0 0.0
      %228 = vmatprep.subr.mxu0 0.0
      %229 = vmatpush1.msra.mxu0 0.0
      %230 = vmatprep.subr.mxu0 0.0
      %231 = vmatpush1.msra.mxu0 0.0
      %232 = vmatprep.mubr.f32.mxu0 0.0
      %v233 = vand.u32 %v155, 4294901760
      %v234 = vsub.f32 %v155, %v233
      %v235 = vand.u32 %v234, 4294901760
      %v236 = vsub.f32 %v234, %v235
      %v237 = vand.u32 %v236, 4294901760
      %238 = vmatmul.mubr.f32.gmra.mrb[0].mxu0 %v237
      %v239 = vpop.f32.mrb[0].mxu0
      %v240 = vadd.f32 0.0, %v239
      %v241 = vpop.f32.mrb[0].mxu0
      %242 = vmatprep.mubr.f32.mxu0 0.0
      %v243 = vand.u32 %v158, 4294901760
      %v244 = vsub.f32 %v158, %v243
      %v245 = vand.u32 %v244, 4294901760
      %v246 = vsub.f32 %v244, %v245
      %v247 = vand.u32 %v246, 4294901760
      %248 = vmatmul.mubr.f32.gmra.mrb[0].mxu0 %v247
      %v249 = vpop.f32.mrb[0].mxu0
      %v250 = vadd.f32 0.0, %v249
      %v251 = vpop.f32.mrb[0].mxu0
      %252 = vmatprep.mubr.f32.mxu0 0.0
      %v253 = vand.u32 %v161, 4294901760
      %v254 = vsub.f32 %v161, %v253
      %v255 = vand.u32 %v254, 4294901760
      %v256 = vsub.f32 %v254, %v255
      %v257 = vand.u32 %v256, 4294901760
      %258 = vmatmul.mubr.f32.gmra.mrb[0].mxu0 %v257
      %v259 = vpop.f32.mrb[0].mxu0
      %v260 = vadd.f32 0.0, %v259
      %v261 = vpop.f32.mrb[0].mxu0
      %262 = vmatprep.mubr.f32.mxu0 0.0
      %v263 = vand.u32 %v164, 4294901760
      %v264 = vsub.f32 %v164, %v263
      %v265 = vand.u32 %v264, 4294901760
      %v266 = vsub.f32 %v264, %v265
      %v267 = vand.u32 %v266, 4294901760
      %268 = vmatmul.mubr.f32.gmra.mrb[0].mxu0 %v267
      %v269 = vpop.f32.mrb[0].mxu0
      %v270 = vadd.f32 0.0, %v269
      %v271 = vpop.f32.mrb[0].mxu0
      %272 = vdwg.mxu0
      %273 = vmatprep.subr.mxu0 0.0
      %v274 = vand.u32 %v151, 4294901760
      %v275 = vsub.f32 %v151, %v274
      %v276 = vand.u32 %v275, 4294901760
      %v277 = vsub.f32 %v275, %v276
      %v278 = vand.u32 %v277, 4294901760
      %279 = vmatpush1.msra.mxu0 %v278
      %280 = vmatprep.subr.mxu0 0.0
      %v281 = vand.u32 %v152, 4294901760
      %v282 = vsub.f32 %v152, %v281
      %v283 = vand.u32 %v282, 4294901760
      %v284 = vsub.f32 %v282, %v283
      %v285 = vand.u32 %v284, 4294901760
      %286 = vmatpush1.msra.mxu0 %v285
      %287 = vmatprep.subr.mxu0 0.0
      %288 = vmatpush1.msra.mxu0 0.0
      %289 = vmatprep.subr.mxu0 0.0
      %290 = vmatpush1.msra.mxu0 0.0
      %291 = vmatprep.subr.mxu0 0.0
      %292 = vmatpush1.msra.mxu0 0.0
      %293 = vmatprep.subr.mxu0 0.0
      %294 = vmatpush1.msra.mxu0 0.0
      %295 = vmatprep.subr.mxu0 0.0
      %296 = vmatpush1.msra.mxu0 0.0
      %297 = vmatprep.subr.mxu0 0.0
      %298 = vmatpush1.msra.mxu0 0.0
      %299 = vmatprep.subr.mxu0 0.0
      %300 = vmatpush1.msra.mxu0 0.0
      %301 = vmatprep.subr.mxu0 0.0
      %302 = vmatpush1.msra.mxu0 0.0
      %303 = vmatprep.subr.mxu0 0.0
      %304 = vmatpush1.msra.mxu0 0.0
      %305 = vmatprep.subr.mxu0 0.0
      %306 = vmatpush1.msra.mxu0 0.0
      %307 = vmatprep.subr.mxu0 0.0
      %308 = vmatpush1.msra.mxu0 0.0
      %309 = vmatprep.subr.mxu0 0.0
      %310 = vmatpush1.msra.mxu0 0.0
      %311 = vmatprep.subr.mxu0 0.0
      %312 = vmatpush1.msra.mxu0 0.0
      %313 = vmatprep.subr.mxu0 0.0
      %314 = vmatpush1.msra.mxu0 0.0
      %315 = vmatprep.subr.mxu0 0.0
      %316 = vmatpush1.msra.mxu0 0.0
      %317 = vmatprep.subr.mxu0 0.0
      %318 = vmatpush1.msra.mxu0 0.0
      %319 = vmatprep.subr.mxu0 0.0
      %320 = vmatpush1.msra.mxu0 0.0
      %321 = vmatprep.subr.mxu0 0.0
      %322 = vmatpush1.msra.mxu0 0.0
      %323 = vmatprep.subr.mxu0 0.0
      %324 = vmatpush1.msra.mxu0 0.0
      %325 = vmatprep.subr.mxu0 0.0
      %326 = vmatpush1.msra.mxu0 0.0
      %327 = vmatprep.subr.mxu0 0.0
      %328 = vmatpush1.msra.mxu0 0.0
      %329 = vmatprep.subr.mxu0 0.0
      %330 = vmatpush1.msra.mxu0 0.0
      %331 = vmatprep.subr.mxu0 0.0
      %332 = vmatpush1.msra.mxu0 0.0
      %333 = vmatprep.subr.mxu0 0.0
      %334 = vmatpush1.msra.mxu0 0.0
      %335 = vmatprep.subr.mxu0 0.0
      %336 = vmatpush1.msra.mxu0 0.0
      %337 = vmatprep.subr.mxu0 0.0
      %338 = vmatpush1.msra.mxu0 0.0
      %339 = vmatprep.subr.mxu0 0.0
      %340 = vmatpush1.msra.mxu0 0.0
      %341 = vmatprep.subr.mxu0 0.0
      %342 = vmatpush1.msra.mxu0 0.0
      %343 = vmatprep.subr.mxu0 0.0
      %344 = vmatpush1.msra.mxu0 0.0
      %345 = vmatprep.subr.mxu0 0.0
      %346 = vmatpush1.msra.mxu0 0.0
      %347 = vmatprep.mubr.f32.mxu0 0.0
      %v348 = vand.u32 %v155, 4294901760
      %349 = vmatmul.mubr.f32.gmra.mrb[0].mxu0 %v348
      %v350 = vpop.f32.mrb[0].mxu0
      %v351 = vadd.f32 %v240, %v350
      %v352 = vpop.f32.mrb[0].mxu0
      %353 = vmatprep.mubr.f32.mxu0 0.0
      %v354 = vand.u32 %v158, 4294901760
      %355 = vmatmul.mubr.f32.gmra.mrb[0].mxu0 %v354
      %v356 = vpop.f32.mrb[0].mxu0
      %v357 = vadd.f32 %v250, %v356
      %v358 = vpop.f32.mrb[0].mxu0
      %359 = vmatprep.mubr.f32.mxu0 0.0
      %v360 = vand.u32 %v161, 4294901760
      %361 = vmatmul.mubr.f32.gmra.mrb[0].mxu0 %v360
      %v362 = vpop.f32.mrb[0].mxu0
      %v363 = vadd.f32 %v260, %v362
      %v364 = vpop.f32.mrb[0].mxu0
      %365 = vmatprep.mubr.f32.mxu0 0.0
      %v366 = vand.u32 %v164, 4294901760
      %367 = vmatmul.mubr.f32.gmra.mrb[0].mxu0 %v366
      %v368 = vpop.f32.mrb[0].mxu0
      %v369 = vadd.f32 %v270, %v368
      %v370 = vpop.f32.mrb[0].mxu0
      %371 = vdwg.mxu0
      %372 = vmatprep.subr.mxu0 0.0
      %v373 = vand.u32 %v151, 4294901760
      %v374 = vsub.f32 %v151, %v373
      %375 = vmatpush1.msra.mxu0 %v374
      %376 = vmatprep.subr.mxu0 0.0
      %v377 = vand.u32 %v152, 4294901760
      %v378 = vsub.f32 %v152, %v377
      %379 = vmatpush1.msra.mxu0 %v378
      %380 = vmatprep.subr.mxu0 0.0
      %381 = vmatpush1.msra.mxu0 0.0
      %382 = vmatprep.subr.mxu0 0.0
      %383 = vmatpush1.msra.mxu0 0.0
      %384 = vmatprep.subr.mxu0 0.0
      %385 = vmatpush1.msra.mxu0 0.0
      %386 = vmatprep.subr.mxu0 0.0
      %387 = vmatpush1.msra.mxu0 0.0
      %388 = vmatprep.subr.mxu0 0.0
      %389 = vmatpush1.msra.mxu0 0.0
      %390 = vmatprep.subr.mxu0 0.0
      %391 = vmatpush1.msra.mxu0 0.0
      %392 = vmatprep.subr.mxu0 0.0
      %393 = vmatpush1.msra.mxu0 0.0
      %394 = vmatprep.subr.mxu0 0.0
      %395 = vmatpush1.msra.mxu0 0.0
      %396 = vmatprep.subr.mxu0 0.0
      %397 = vmatpush1.msra.mxu0 0.0
      %398 = vmatprep.subr.mxu0 0.0
      %399 = vmatpush1.msra.mxu0 0.0
      %400 = vmatprep.subr.mxu0 0.0
      %401 = vmatpush1.msra.mxu0 0.0
      %402 = vmatprep.subr.mxu0 0.0
      %403 = vmatpush1.msra.mxu0 0.0
      %404 = vmatprep.subr.mxu0 0.0
      %405 = vmatpush1.msra.mxu0 0.0
      %406 = vmatprep.subr.mxu0 0.0
      %407 = vmatpush1.msra.mxu0 0.0
      %408 = vmatprep.subr.mxu0 0.0
      %409 = vmatpush1.msra.mxu0 0.0
      %410 = vmatprep.subr.mxu0 0.0
      %411 = vmatpush1.msra.mxu0 0.0
      %412 = vmatprep.subr.mxu0 0.0
      %413 = vmatpush1.msra.mxu0 0.0
      %414 = vmatprep.subr.mxu0 0.0
      %415 = vmatpush1.msra.mxu0 0.0
      %416 = vmatprep.subr.mxu0 0.0
      %417 = vmatpush1.msra.mxu0 0.0
      %418 = vmatprep.subr.mxu0 0.0
      %419 = vmatpush1.msra.mxu0 0.0
      %420 = vmatprep.subr.mxu0 0.0
      %421 = vmatpush1.msra.mxu0 0.0
      %422 = vmatprep.subr.mxu0 0.0
      %423 = vmatpush1.msra.mxu0 0.0
      %424 = vmatprep.subr.mxu0 0.0
      %425 = vmatpush1.msra.mxu0 0.0
      %426 = vmatprep.subr.mxu0 0.0
      %427 = vmatpush1.msra.mxu0 0.0
      %428 = vmatprep.subr.mxu0 0.0
      %429 = vmatpush1.msra.mxu0 0.0
      %430 = vmatprep.subr.mxu0 0.0
      %431 = vmatpush1.msra.mxu0 0.0
      %432 = vmatprep.subr.mxu0 0.0
      %433 = vmatpush1.msra.mxu0 0.0
      %434 = vmatprep.subr.mxu0 0.0
      %435 = vmatpush1.msra.mxu0 0.0
      %436 = vmatprep.subr.mxu0 0.0
      %437 = vmatpush1.msra.mxu0 0.0
      %438 = vmatprep.subr.mxu0 0.0
      %439 = vmatpush1.msra.mxu0 0.0
      %440 = vmatprep.mubr.f32.mxu0 0.0
      %v441 = vand.u32 %v155, 4294901760
      %v442 = vsub.f32 %v155, %v441
      %443 = vmatmul.mubr.f32.gmra.mrb[0].mxu0 %v442
      %v444 = vpop.f32.mrb[0].mxu0
      %v445 = vadd.f32 %v351, %v444
      %v446 = vpop.f32.mrb[0].mxu0
      %447 = vmatprep.mubr.f32.mxu0 0.0
      %v448 = vand.u32 %v158, 4294901760
      %v449 = vsub.f32 %v158, %v448
      %450 = vmatmul.mubr.f32.gmra.mrb[0].mxu0 %v449
      %v451 = vpop.f32.mrb[0].mxu0
      %v452 = vadd.f32 %v357, %v451
      %v453 = vpop.f32.mrb[0].mxu0
      %454 = vmatprep.mubr.f32.mxu0 0.0
      %v455 = vand.u32 %v161, 4294901760
      %v456 = vsub.f32 %v161, %v455
      %457 = vmatmul.mubr.f32.gmra.mrb[0].mxu0 %v456
      %v458 = vpop.f32.mrb[0].mxu0
      %v459 = vadd.f32 %v363, %v458
      %v460 = vpop.f32.mrb[0].mxu0
      %461 = vmatprep.mubr.f32.mxu0 0.0
      %v462 = vand.u32 %v164, 4294901760
      %v463 = vsub.f32 %v164, %v462
      %464 = vmatmul.mubr.f32.gmra.mrb[0].mxu0 %v463
      %v465 = vpop.f32.mrb[0].mxu0
      %v466 = vadd.f32 %v369, %v465
      %v467 = vpop.f32.mrb[0].mxu0
      %468 = vdwg.mxu0
      %469 = vmatprep.subr.mxu0 0.0
      %v470 = vand.u32 %v151, 4294901760
      %471 = vmatpush1.msra.mxu0 %v470
      %472 = vmatprep.subr.mxu0 0.0
      %v473 = vand.u32 %v152, 4294901760
      %474 = vmatpush1.msra.mxu0 %v473
      %475 = vmatprep.subr.mxu0 0.0
      %476 = vmatpush1.msra.mxu0 0.0
      %477 = vmatprep.subr.mxu0 0.0
      %478 = vmatpush1.msra.mxu0 0.0
      %479 = vmatprep.subr.mxu0 0.0
      %480 = vmatpush1.msra.mxu0 0.0
      %481 = vmatprep.subr.mxu0 0.0
      %482 = vmatpush1.msra.mxu0 0.0
      %483 = vmatprep.subr.mxu0 0.0
      %484 = vmatpush1.msra.mxu0 0.0
      %485 = vmatprep.subr.mxu0 0.0
      %486 = vmatpush1.msra.mxu0 0.0
      %487 = vmatprep.subr.mxu0 0.0
      %488 = vmatpush1.msra.mxu0 0.0
      %489 = vmatprep.subr.mxu0 0.0
      %490 = vmatpush1.msra.mxu0 0.0
      %491 = vmatprep.subr.mxu0 0.0
      %492 = vmatpush1.msra.mxu0 0.0
      %493 = vmatprep.subr.mxu0 0.0
      %494 = vmatpush1.msra.mxu0 0.0
      %495 = vmatprep.subr.mxu0 0.0
      %496 = vmatpush1.msra.mxu0 0.0
      %497 = vmatprep.subr.mxu0 0.0
      %498 = vmatpush1.msra.mxu0 0.0
      %499 = vmatprep.subr.mxu0 0.0
      %500 = vmatpush1.msra.mxu0 0.0
      %501 = vmatprep.subr.mxu0 0.0
      %502 = vmatpush1.msra.mxu0 0.0
      %503 = vmatprep.subr.mxu0 0.0
      %504 = vmatpush1.msra.mxu0 0.0
      %505 = vmatprep.subr.mxu0 0.0
      %506 = vmatpush1.msra.mxu0 0.0
      %507 = vmatprep.subr.mxu0 0.0
      %508 = vmatpush1.msra.mxu0 0.0
      %509 = vmatprep.subr.mxu0 0.0
      %510 = vmatpush1.msra.mxu0 0.0
      %511 = vmatprep.subr.mxu0 0.0
      %512 = vmatpush1.msra.mxu0 0.0
      %513 = vmatprep.subr.mxu0 0.0
      %514 = vmatpush1.msra.mxu0 0.0
      %515 = vmatprep.subr.mxu0 0.0
      %516 = vmatpush1.msra.mxu0 0.0
      %517 = vmatprep.subr.mxu0 0.0
      %518 = vmatpush1.msra.mxu0 0.0
      %519 = vmatprep.subr.mxu0 0.0
      %520 = vmatpush1.msra.mxu0 0.0
      %521 = vmatprep.subr.mxu0 0.0
      %522 = vmatpush1.msra.mxu0 0.0
      %523 = vmatprep.subr.mxu0 0.0
      %524 = vmatpush1.msra.mxu0 0.0
      %525 = vmatprep.subr.mxu0 0.0
      %526 = vmatpush1.msra.mxu0 0.0
      %527 = vmatprep.subr.mxu0 0.0
      %528 = vmatpush1.msra.mxu0 0.0
      %529 = vmatprep.subr.mxu0 0.0
      %530 = vmatpush1.msra.mxu0 0.0
      %531 = vmatprep.subr.mxu0 0.0
      %532 = vmatpush1.msra.mxu0 0.0
      %533 = vmatprep.subr.mxu0 0.0
      %534 = vmatpush1.msra.mxu0 0.0
      %535 = vmatprep.mubr.f32.mxu0 0.0
      %v536 = vand.u32 %v155, 4294901760
      %v537 = vsub.f32 %v155, %v536
      %v538 = vand.u32 %v537, 4294901760
      %539 = vmatmul.mubr.f32.gmra.mrb[0].mxu0 %v538
      %v540 = vpop.f32.mrb[0].mxu0
      %v541 = vadd.f32 %v445, %v540
      %v542 = vpop.f32.mrb[0].mxu0
      %543 = vmatprep.mubr.f32.mxu0 0.0
      %v544 = vand.u32 %v158, 4294901760
      %v545 = vsub.f32 %v158, %v544
      %v546 = vand.u32 %v545, 4294901760
      %547 = vmatmul.mubr.f32.gmra.mrb[0].mxu0 %v546
      %v548 = vpop.f32.mrb[0].mxu0
      %v549 = vadd.f32 %v452, %v548
      %v550 = vpop.f32.mrb[0].mxu0
      %551 = vmatprep.mubr.f32.mxu0 0.0
      %v552 = vand.u32 %v161, 4294901760
      %v553 = vsub.f32 %v161, %v552
      %v554 = vand.u32 %v553, 4294901760
      %555 = vmatmul.mubr.f32.gmra.mrb[0].mxu0 %v554
      %v556 = vpop.f32.mrb[0].mxu0
      %v557 = vadd.f32 %v459, %v556
      %v558 = vpop.f32.mrb[0].mxu0
      %559 = vmatprep.mubr.f32.mxu0 0.0
      %v560 = vand.u32 %v164, 4294901760
      %v561 = vsub.f32 %v164, %v560
      %v562 = vand.u32 %v561, 4294901760
      %563 = vmatmul.mubr.f32.gmra.mrb[0].mxu0 %v562
      %v564 = vpop.f32.mrb[0].mxu0
      %v565 = vadd.f32 %v466, %v564
      %v566 = vpop.f32.mrb[0].mxu0
      %567 = vdwg.mxu0
      %568 = vmatprep.subr.mxu0 0.0
      %v569 = vand.u32 %v151, 4294901760
      %v570 = vsub.f32 %v151, %v569
      %v571 = vand.u32 %v570, 4294901760
      %572 = vmatpush1.msra.mxu0 %v571
      %573 = vmatprep.subr.mxu0 0.0
      %v574 = vand.u32 %v152, 4294901760
      %v575 = vsub.f32 %v152, %v574
      %v576 = vand.u32 %v575, 4294901760
      %577 = vmatpush1.msra.mxu0 %v576
      %578 = vmatprep.subr.mxu0 0.0
      %579 = vmatpush1.msra.mxu0 0.0
      %580 = vmatprep.subr.mxu0 0.0
      %581 = vmatpush1.msra.mxu0 0.0
      %582 = vmatprep.subr.mxu0 0.0
      %583 = vmatpush1.msra.mxu0 0.0
      %584 = vmatprep.subr.mxu0 0.0
      %585 = vmatpush1.msra.mxu0 0.0
      %586 = vmatprep.subr.mxu0 0.0
      %587 = vmatpush1.msra.mxu0 0.0
      %588 = vmatprep.subr.mxu0 0.0
      %589 = vmatpush1.msra.mxu0 0.0
      %590 = vmatprep.subr.mxu0 0.0
      %591 = vmatpush1.msra.mxu0 0.0
      %592 = vmatprep.subr.mxu0 0.0
      %593 = vmatpush1.msra.mxu0 0.0
      %594 = vmatprep.subr.mxu0 0.0
      %595 = vmatpush1.msra.mxu0 0.0
      %596 = vmatprep.subr.mxu0 0.0
      %597 = vmatpush1.msra.mxu0 0.0
      %598 = vmatprep.subr.mxu0 0.0
      %599 = vmatpush1.msra.mxu0 0.0
      %600 = vmatprep.subr.mxu0 0.0
      %601 = vmatpush1.msra.mxu0 0.0
      %602 = vmatprep.subr.mxu0 0.0
      %603 = vmatpush1.msra.mxu0 0.0
      %604 = vmatprep.subr.mxu0 0.0
      %605 = vmatpush1.msra.mxu0 0.0
      %606 = vmatprep.subr.mxu0 0.0
      %607 = vmatpush1.msra.mxu0 0.0
      %608 = vmatprep.subr.mxu0 0.0
      %609 = vmatpush1.msra.mxu0 0.0
      %610 = vmatprep.subr.mxu0 0.0
      %611 = vmatpush1.msra.mxu0 0.0
      %612 = vmatprep.subr.mxu0 0.0
      %613 = vmatpush1.msra.mxu0 0.0
      %614 = vmatprep.subr.mxu0 0.0
      %615 = vmatpush1.msra.mxu0 0.0
      %616 = vmatprep.subr.mxu0 0.0
      %617 = vmatpush1.msra.mxu0 0.0
      %618 = vmatprep.subr.mxu0 0.0
      %619 = vmatpush1.msra.mxu0 0.0
      %620 = vmatprep.subr.mxu0 0.0
      %621 = vmatpush1.msra.mxu0 0.0
      %622 = vmatprep.subr.mxu0 0.0
      %623 = vmatpush1.msra.mxu0 0.0
      %624 = vmatprep.subr.mxu0 0.0
      %625 = vmatpush1.msra.mxu0 0.0
      %626 = vmatprep.subr.mxu0 0.0
      %627 = vmatpush1.msra.mxu0 0.0
      %628 = vmatprep.subr.mxu0 0.0
      %629 = vmatpush1.msra.mxu0 0.0
      %630 = vmatprep.subr.mxu0 0.0
      %631 = vmatpush1.msra.mxu0 0.0
      %632 = vmatprep.subr.mxu0 0.0
      %633 = vmatpush1.msra.mxu0 0.0
      %634 = vmatprep.subr.mxu0 0.0
      %635 = vmatpush1.msra.mxu0 0.0
      %636 = vmatprep.subr.mxu0 0.0
      %637 = vmatpush1.msra.mxu0 0.0
      %638 = vmatprep.mubr.f32.mxu0 0.0
      %v639 = vand.u32 %v155, 4294901760
      %640 = vmatmul.mubr.f32.gmra.mrb[0].mxu0 %v639
      %v641 = vpop.f32.mrb[0].mxu0
      %v642 = vadd.f32 %v541, %v641
      %v643 = vpop.f32.mrb[0].mxu0
      %644 = vmatprep.mubr.f32.mxu0 0.0
      %v645 = vand.u32 %v158, 4294901760
      %646 = vmatmul.mubr.f32.gmra.mrb[0].mxu0 %v645
      %v647 = vpop.f32.mrb[0].mxu0
      %v648 = vadd.f32 %v549, %v647
      %v649 = vpop.f32.mrb[0].mxu0
      %650 = vmatprep.mubr.f32.mxu0 0.0
      %v651 = vand.u32 %v161, 4294901760
      %652 = vmatmul.mubr.f32.gmra.mrb[0].mxu0 %v651
      %v653 = vpop.f32.mrb[0].mxu0
      %v654 = vadd.f32 %v557, %v653
      %v655 = vpop.f32.mrb[0].mxu0
      %656 = vmatprep.mubr.f32.mxu0 0.0
      %v657 = vand.u32 %v164, 4294901760
      %658 = vmatmul.mubr.f32.gmra.mrb[0].mxu0 %v657
      %v659 = vpop.f32.mrb[0].mxu0
      %v660 = vadd.f32 %v565, %v659
      %v661 = vpop.f32.mrb[0].mxu0
      %662 = vdwg.mxu0
      %663 = vmatprep.subr.mxu0 0.0
      %v664 = vand.u32 %v151, 4294901760
      %665 = vmatpush1.msra.mxu0 %v664
      %666 = vmatprep.subr.mxu0 0.0
      %v667 = vand.u32 %v152, 4294901760
      %668 = vmatpush1.msra.mxu0 %v667
      %669 = vmatprep.subr.mxu0 0.0
      %670 = vmatpush1.msra.mxu0 0.0
      %671 = vmatprep.subr.mxu0 0.0
      %672 = vmatpush1.msra.mxu0 0.0
      %673 = vmatprep.subr.mxu0 0.0
      %674 = vmatpush1.msra.mxu0 0.0
      %675 = vmatprep.subr.mxu0 0.0
      %676 = vmatpush1.msra.mxu0 0.0
      %677 = vmatprep.subr.mxu0 0.0
      %678 = vmatpush1.msra.mxu0 0.0
      %679 = vmatprep.subr.mxu0 0.0
      %680 = vmatpush1.msra.mxu0 0.0
      %681 = vmatprep.subr.mxu0 0.0
      %682 = vmatpush1.msra.mxu0 0.0
      %683 = vmatprep.subr.mxu0 0.0
      %684 = vmatpush1.msra.mxu0 0.0
      %685 = vmatprep.subr.mxu0 0.0
      %686 = vmatpush1.msra.mxu0 0.0
      %687 = vmatprep.subr.mxu0 0.0
      %688 = vmatpush1.msra.mxu0 0.0
      %689 = vmatprep.subr.mxu0 0.0
      %690 = vmatpush1.msra.mxu0 0.0
      %691 = vmatprep.subr.mxu0 0.0
      %692 = vmatpush1.msra.mxu0 0.0
      %693 = vmatprep.subr.mxu0 0.0
      %694 = vmatpush1.msra.mxu0 0.0
      %695 = vmatprep.subr.mxu0 0.0
      %696 = vmatpush1.msra.mxu0 0.0
      %697 = vmatprep.subr.mxu0 0.0
      %698 = vmatpush1.msra.mxu0 0.0
      %699 = vmatprep.subr.mxu0 0.0
      %700 = vmatpush1.msra.mxu0 0.0
      %701 = vmatprep.subr.mxu0 0.0
      %702 = vmatpush1.msra.mxu0 0.0
      %703 = vmatprep.subr.mxu0 0.0
      %704 = vmatpush1.msra.mxu0 0.0
      %705 = vmatprep.subr.mxu0 0.0
      %706 = vmatpush1.msra.mxu0 0.0
      %707 = vmatprep.subr.mxu0 0.0
      %708 = vmatpush1.msra.mxu0 0.0
      %709 = vmatprep.subr.mxu0 0.0
      %710 = vmatpush1.msra.mxu0 0.0
      %711 = vmatprep.subr.mxu0 0.0
      %712 = vmatpush1.msra.mxu0 0.0
      %713 = vmatprep.subr.mxu0 0.0
      %714 = vmatpush1.msra.mxu0 0.0
      %715 = vmatprep.subr.mxu0 0.0
      %716 = vmatpush1.msra.mxu0 0.0
      %717 = vmatprep.subr.mxu0 0.0
      %718 = vmatpush1.msra.mxu0 0.0
      %719 = vmatprep.subr.mxu0 0.0
      %720 = vmatpush1.msra.mxu0 0.0
      %721 = vmatprep.subr.mxu0 0.0
      %722 = vmatpush1.msra.mxu0 0.0
      %723 = vmatprep.subr.mxu0 0.0
      %724 = vmatpush1.msra.mxu0 0.0
      %725 = vmatprep.subr.mxu0 0.0
      %726 = vmatpush1.msra.mxu0 0.0
      %727 = vmatprep.subr.mxu0 0.0
      %728 = vmatpush1.msra.mxu0 0.0
      %729 = vmatprep.mubr.f32.mxu0 0.0
      %v730 = vand.u32 %v155, 4294901760
      %731 = vmatmul.mubr.f32.gmra.mrb[0].mxu0 %v730
      %v732 = vpop.f32.mrb[0].mxu0
      %v733 = vadd.f32 %v642, %v732
      %v734 = vpop.f32.mrb[0].mxu0
      %735 = vmatprep.mubr.f32.mxu0 0.0
      %v736 = vand.u32 %v158, 4294901760
      %737 = vmatmul.mubr.f32.gmra.mrb[0].mxu0 %v736
      %v738 = vpop.f32.mrb[0].mxu0
      %v739 = vadd.f32 %v648, %v738
      %v740 = vpop.f32.mrb[0].mxu0
      %741 = vmatprep.mubr.f32.mxu0 0.0
      %v742 = vand.u32 %v161, 4294901760
      %743 = vmatmul.mubr.f32.gmra.mrb[0].mxu0 %v742
      %v744 = vpop.f32.mrb[0].mxu0
      %v745 = vadd.f32 %v654, %v744
      %v746 = vpop.f32.mrb[0].mxu0
      %747 = vmatprep.mubr.f32.mxu0 0.0
      %v748 = vand.u32 %v164, 4294901760
      %749 = vmatmul.mubr.f32.gmra.mrb[0].mxu0 %v748
      %v750 = vpop.f32.mrb[0].mxu0
      %v751 = vadd.f32 %v660, %v750
      %v752 = vpop.f32.mrb[0].mxu0
      %753 = vdwg.mxu0
      %vm754 = vcmask 64512
      %755 = vst.msk [vmem:[%s145] sm:$0xff] %vm754, %v733
      %756 = vst.msk [vmem:[%s145 + $0x8] sm:$0xff] %vm754, %v739
      %757 = vst.msk [vmem:[%s145 + $0x10] sm:$0xff] %vm754, %v745
      %758 = vst.msk [vmem:[%s145 + $0x18] sm:$0xff] %vm754, %v751
      %s759 = smul.u32 4, %s13
      %p760 = scmp.lt.s32.totalorder %s759, 15
      %s761 = scalar_select %p760, %s759, 15
      %s762 = smul.addr %s761, 8
      %s763 = scalar_lea.vmem %s2, %s762
      // Predicated region
      $region29: #{tpu_custom_call.1} parent=27 // pred_check
        %p764 = pneg %p78
      $region30: #{tpu_custom_call.1} parent=27 // pred_check_branch
        %766 = sbr.rel (%p764) target = $region32
      $region31: #{tpu_custom_call.1} parent=27 // pred_region
        %s767 = smul.u32 4, %s13
      $region32: #{tpu_custom_call.1} parent=27 // pred_fallthru
        _
    $region28: #{tpu_custom_call.1} parent=5 // pred_fallthru
      _
    %p768 = scmp.le.s32.totalorder 2, %s8
    // Predicated region
    $region33: #{tpu_custom_call.1} parent=5 // pred_check
      %p769 = pneg %p768
    $region34: #{tpu_custom_call.1} parent=5 // pred_check_branch
      %771 = sbr.rel (%p769) target = $region36
    $region35: #{tpu_custom_call.1} parent=5 // pred_region
      %s772 = ssub.s32 %s8, 2
      // Predicated region
      $region37: #{tpu_custom_call.1} parent=35 // pred_check
        %p773 = pneg %p84
      $region38: #{tpu_custom_call.1} parent=35 // pred_check_branch
        %775 = sbr.rel (%p773) target = $region40
      $region39: #{tpu_custom_call.1} parent=35 // pred_region
        %s776 = smul.u32 4, %s14
        %p777 = scmp.lt.s32.totalorder %s776, 15
        %s778 = scalar_select %p777, %s776, 15
        %s779 = smul.addr %s778, 8
        %s780 = scalar_lea.vmem %s2, %s779
      $region40: #{tpu_custom_call.1} parent=35 // pred_fallthru
        _
    $region36: #{tpu_custom_call.1} parent=5 // pred_fallthru
      _
  $region6: #{tpu_custom_call.1} parent=0 // loop_footer
    %s12 = sadd.s32 1, %s8
  $region7: #{tpu_custom_call.1} parent=0 // loop_footer_branch
    %7 = sbr.rel target = $region3
  $region8: #{tpu_custom_call.1} parent=0 // loop_exit
    _

</llo_original>
